<compile_context>
chip_gen: v6e
topology: v6e:2x2x1
jax: 0.10.0
libtpu: 0.0.40
codegen_flags: <defaults>
</compile_context>

<pallas_src>
from functools import partial

import jax
import jax.numpy as jnp
from jax.experimental import pallas as pl
from jax.experimental.pallas import tpu as pltpu


def _patchify_matmul_kernel(wt_ref, p_ref, o_ref):
    # wt_ref: (hidden, C*K)   p_ref: (1, C*K, tsp)   o_ref: (1, hidden, tsp)
    o_ref[0] = jnp.dot(
        wt_ref[...], p_ref[0], preferred_element_type=jnp.float32
    ).astype(o_ref.dtype)


def _pick_spatial_tile(sp, ck, hidden, itemsize):
    """Largest lane tile that (a) divides sp and (b) keeps the double-buffered
    in+out tiles well under v7x's 32 MiB scoped-VMEM default."""
    budget = 16 * 1024 * 1024
    per_lane = 2 * (ck + hidden) * itemsize  # double-buffered input + output
    cap = max(128, (budget // per_lane) // 128 * 128)
    cap = min(cap, 8192)  # beyond this the pipeline is already at roofline
    if sp <= cap:
        return sp
    t = cap
    while t >= 128:
        if sp % t == 0:
            return t
        t -= 128
    return sp  # fallback: single block (correct, just less pipelining)


@partial(jax.jit, static_argnames=("patch_size", "hidden_size"))
def patchify2d_forward(x, weight, patch_size, hidden_size):
    """Patchify2D.forward with grouped (per-channel-group) conv.

    x:      (B, *channel_dims, H, W)      (PyTorch NCHW-style layout)
    weight: (hidden_size, 1, ph, pw)      grouped Conv2d weight, groups = C
    returns (B, hidden_size, H // ph, W // pw)
    """
    B = x.shape[0]
    H, W = x.shape[-2], x.shape[-1]
    # x.flatten(start_dim=1, end_dim=-3)
    x = x.reshape(B, -1, H, W)
    C = x.shape[1]
    ph, pw = patch_size
    Hp, Wp = H // ph, W // pw
    assert hidden_size % C == 0, "grouped conv requires hidden % in_channels == 0"
    N = hidden_size // C
    K = ph * pw
    CK = C * K
    sp = Hp * Wp
    dtype = x.dtype

    # Crop (conv with stride == kernel floors the spatial extent).
    x = x[:, :, : Hp * ph, : Wp * pw]

    # Patches with the spatial axis lane-dense: (B, C*K, Hp*Wp),
    # row order (c, i, j) -> c*K + i*pw + j.
    # TODO(synk): fold this single extraction transpose into the kernel via
    # strided in-kernel loads on the native (B,C,H,W) block; kept in the
    # wrapper because lane-strided gathers are fragile to lower in Mosaic.
    p = x.reshape(B, C, Hp, ph, Wp, pw)
    p = jnp.transpose(p, (0, 1, 3, 5, 2, 4)).reshape(B, CK, sp)

    # Block-diagonal weight (hidden, C*K): group g owns output rows
    # [g*N, (g+1)*N) and input columns [g*K, (g+1)*K)  (PyTorch group order).
    w = weight.reshape(C, N, K).astype(dtype)
    eye = jnp.eye(C, dtype=dtype)
    wt = jnp.einsum("gnk,gc->gnck", w, eye).reshape(C * N, CK)

    tsp = _pick_spatial_tile(sp, CK, hidden_size, jnp.dtype(dtype).itemsize)
    grid = (B, sp // tsp)

    out = pl.pallas_call(
        _patchify_matmul_kernel,
        out_shape=jax.ShapeDtypeStruct((B, hidden_size, sp), dtype),
        grid=grid,
        in_specs=[
            # Tiny block-diagonal weight: same block every step -> resident.
            pl.BlockSpec((hidden_size, CK), lambda b, m: (0, 0)),
            # Patch tile: lane-dense spatial chunk of one batch element.
            pl.BlockSpec((1, CK, tsp), lambda b, m: (b, 0, m)),
        ],
        out_specs=pl.BlockSpec((1, hidden_size, tsp), lambda b, m: (b, 0, m)),
        compiler_params=pltpu.CompilerParams(
            dimension_semantics=("parallel", "parallel")
        ),
    )(wt, p)

    return out.reshape(B, hidden_size, Hp, Wp)


if __name__ == "__main__":
    # Small config consistent with the module:
    #   channel_size=[4], data_size=[16,16], patch_size=[2,2], hidden_size=32
    B, C, H, W = 2, 4, 16, 16
    patch_size = (2, 2)
    hidden_size = 32

    key = jax.random.PRNGKey(0)
    kx, kw = jax.random.split(key)
    x = jax.random.normal(kx, (B, C, H, W), dtype=jnp.float32)
    # Deterministic synthetic grouped-Conv2d weight: (hidden, in_ch/groups=1, ph, pw)
    weight = 0.02 * jax.random.normal(
        kw, (hidden_size, 1, patch_size[0], patch_size[1]), dtype=jnp.float32
    )

    out = patchify2d_forward(x, weight, patch_size, hidden_size)
    out = jax.block_until_ready(out)

    # Pure-JAX reference (grouped conv), for sanity.
    ref = jax.lax.conv_general_dilated(
        x, weight,
        window_strides=patch_size, padding="VALID",
        dimension_numbers=("NCHW", "OIHW", "NCHW"),
        feature_group_count=C,
    )
    assert out.shape == (B, hidden_size, H // patch_size[0], W // patch_size[1])
    assert jnp.allclose(out, ref, atol=1e-5, rtol=1e-5)
    print("KERNEL_OK")
</pallas_src>

<mosaic_0001>
module attributes {stable_mosaic.version = 11 : i64} {
  func.func @_patchify_matmul_kernel(%arg0: i32, %arg1: i32, %arg2: memref<32x16xf32, #tpu.memory_space<vmem>>, %arg3: memref<1x16x64xf32, #tpu.memory_space<vmem>>, %arg4: memref<1x32x64xf32, #tpu.memory_space<vmem>>) attributes {dimension_semantics = [#tpu.dimension_semantics<parallel>, #tpu.dimension_semantics<parallel>], iteration_bounds = array<i64: 2, 1>, scalar_prefetch = 0 : i64, scratch_operands = 0 : i64, tpu.core_type = #tpu.core_type<tc>, window_params = [{pipeline_mode = #tpu.pipeline_mode<synchronous>, transform_indices = @transform_0, window_bounds = array<i64: 32, 16>}, {transform_indices = @transform_1, window_bounds = array<i64: 1, 16, 64>}, {transform_indices = @transform_2, window_bounds = array<i64: 1, 32, 64>}]} {
    %c0 = arith.constant 0 : index
    %c0_0 = arith.constant 0 : index
    %0 = vector.load %arg2[%c0, %c0_0] : memref<32x16xf32, #tpu.memory_space<vmem>>, vector<32x16xf32>
    %c0_1 = arith.constant 0 : index
    %c0_2 = arith.constant 0 : index
    %c0_3 = arith.constant 0 : index
    %1 = vector.load %arg3[%c0_1, %c0_2, %c0_3] : memref<1x16x64xf32, #tpu.memory_space<vmem>>, vector<1x16x64xf32>
    %2 = vector.shape_cast %1 : vector<1x16x64xf32> to vector<16x64xf32>
    %cst = arith.constant dense<0.000000e+00> : vector<32x64xf32>
    %3 = tpu.matmul %0, %2, %cst {dimension_numbers = #tpu.dot_dimension_numbers<[1], [0], [0], [1], [0, 0, 1, 1], [], []>} : vector<32x16xf32>, vector<16x64xf32>, vector<32x64xf32> -> vector<32x64xf32>
    %c0_4 = arith.constant 0 : index
    %c0_5 = arith.constant 0 : index
    %c0_6 = arith.constant 0 : index
    %4 = vector.load %arg4[%c0_4, %c0_5, %c0_6] : memref<1x32x64xf32, #tpu.memory_space<vmem>>, vector<1x32x64xf32>
    %5 = vector.shape_cast %4 : vector<1x32x64xf32> to vector<32x64xf32>
    %6 = vector.shape_cast %3 : vector<32x64xf32> to vector<1x32x64xf32>
    tpu.vector_store %arg4[%c0_4, %c0_5, %c0_6], %6 {strides = array<i32>} : memref<1x32x64xf32, #tpu.memory_space<vmem>>, vector<1x32x64xf32>,
    return
  }
  func.func @transform_0(%arg0: i32, %arg1: i32) -> (i32, i32) {
    %c0_i32 = arith.constant 0 : i32
    %c0_i32_0 = arith.constant 0 : i32
    %c0_i32_1 = arith.constant 0 : i32
    return %c0_i32, %c0_i32_0 : i32, i32
  }
  func.func @transform_1(%arg0: i32, %arg1: i32) -> (i32, i32, i32) {
    %c0_i32 = arith.constant 0 : i32
    %c0_i32_0 = arith.constant 0 : i32
    return %arg0, %c0_i32, %arg1 : i32, i32, i32
  }
  func.func @transform_2(%arg0: i32, %arg1: i32) -> (i32, i32, i32) {
    %c0_i32 = arith.constant 0 : i32
    %c0_i32_0 = arith.constant 0 : i32
    return %arg0, %c0_i32, %arg1 : i32, i32, i32
  }
}

</mosaic_0001>

<llo_original>
// kernel: patchify2d_forward.1
$region0: #{patchify2d_forward.1}
  #allocation0 [shape = 'u32[]', space=smem, size = 0x4, offset = 0x4, fixed_abs, tag = 'smem constant byte address 0x4 - core index']
  #allocation1 [shape = 'u32[144,128]{1,0:T(1,128)}', space=vmem, size = 0x12000, scoped, tag = 'internal scratch']
  %s0 = inlined_call_operand.vmem [shape: f32[32,16], index: 0, kind: input, shape index: {}]
  %s1 = inlined_call_operand.vmem [shape: f32[2,16,64], index: 1, kind: input, shape index: {}]
  %s2 = inlined_call_operand.vmem [shape: f32[2,32,64], index: 2, kind: output, shape index: {}]
  %s3 = sld [smem:[#allocation0]]
  $region41: #{patchify2d_forward.1} parent=0
    _
  %s5 = ssub.s32 1, %s3
  %s6 = scalar_select 0, %s5, %s3
  loop: start=0, step=1, limit=4
  $region2: #{patchify2d_forward.1} parent=0 // loop_pre_header
    _
  $region3: #{patchify2d_forward.1} parent=0 // loop_header
    %s8 = sphi 0, %s12
    %p9 = scmp.ge.s32.totalorder %s8, 4
    %s15 = sphi 0, %s27
    %s16 = sphi 0, %s23
    %s17 = sphi 0, %s15
    %s18 = sphi 0, %s16
    %s19 = sphi 0, %s17
    %s20 = sphi 0, %s18
    %s28 = sphi 0, %s28
    %s30 = sphi 0, %s28
    %s31 = sphi 0, %s30
    %s45 = sphi 0, %s31
    %s53 = sphi 0, %s55
    %s56 = sphi 0, %s53
    %s57 = sphi 0, %s56
    %s73 = sphi 0, %s57
    %s81 = sphi 0, %s83
    %s84 = sphi 0, %s81
    %s85 = sphi 0, %s84
    %s101 = sphi 0, %s85
  $region4: #{patchify2d_forward.1} parent=0 // loop_header_branch
    %11 = sbr.rel (%p9) target = $region8
  $region5: #{patchify2d_forward.1} parent=0 // loop_body
    %s13 = ssub.s32 %s8, 1
    %s14 = ssub.s32 %s8, 2
    %s21 = sadd.s32 1, %s16
    %p22 = scmp.ge.s32.totalorder %s21, 1
    %s23 = scalar_select %p22, 0, %s21
    %s24 = sadd.s32 1, %s15
    %s25 = scalar_select %p22, %s24, %s15
    %p26 = scmp.ge.s32.totalorder %s25, 2
    %s27 = scalar_select %p26, 0, %s25
    %s29 = sadd.s32 %s28, 1
    %p32 = scmp.eq.s32.totalorder %s8, 1
    %p33 = scmp.ne.s32.totalorder %s28, %s30
    %p34 = scmp.eq.s32.totalorder %s8, 0
    %p35 = por %p33, %p34
    %p36 = scmp.ne.s32.totalorder %s28, %s30
    %p37 = scmp.eq.s32.totalorder %s13, 1
    %p38 = por %p36, %p37
    %p39 = scmp.ne.s32.totalorder %s30, %s31
    %p40 = scmp.eq.s32.totalorder %s13, 0
    %p41 = por %p39, %p40
    %p42 = scmp.ne.s32.totalorder %s30, %s31
    %p43 = scmp.eq.s32.totalorder %s14, 1
    %p44 = por %p42, %p43
    %p46 = scmp.ne.s32.totalorder %s31, %s45
    %p47 = scmp.eq.s32.totalorder %s14, 0
    %p48 = por %p46, %p47
    %s49 = ssub.s32 %s15, %s27
    %s50 = ssub.s32 %s16, %s23
    %s51 = sor.u32 %s49, %s50
    %p52 = scmp.eq.s32.totalorder %s51, 0
    %s54 = sadd.s32 %s53, 1
    %s55 = scalar_select %p52, %s53, %s54
    %p58 = pneg %p52
    %p59 = scmp.eq.s32.totalorder %s8, 1
    %p60 = por %p58, %p59
    %p61 = scmp.ne.s32.totalorder %s53, %s56
    %p62 = scmp.eq.s32.totalorder %s8, 0
    %p63 = por %p61, %p62
    %p64 = scmp.ne.s32.totalorder %s53, %s56
    %p65 = scmp.eq.s32.totalorder %s13, 1
    %p66 = por %p64, %p65
    %p67 = scmp.ne.s32.totalorder %s56, %s57
    %p68 = scmp.eq.s32.totalorder %s13, 0
    %p69 = por %p67, %p68
    %p70 = scmp.ne.s32.totalorder %s56, %s57
    %p71 = scmp.eq.s32.totalorder %s14, 1
    %p72 = por %p70, %p71
    %p74 = scmp.ne.s32.totalorder %s57, %s73
    %p75 = scmp.eq.s32.totalorder %s14, 0
    %p76 = por %p74, %p75
    %s77 = ssub.s32 %s15, %s27
    %s78 = ssub.s32 %s16, %s23
    %s79 = sor.u32 %s77, %s78
    %p80 = scmp.eq.s32.totalorder %s79, 0
    %s82 = sadd.s32 %s81, 1
    %s83 = scalar_select %p80, %s81, %s82
    %p86 = pneg %p80
    %p87 = scmp.eq.s32.totalorder %s8, 1
    %p88 = por %p86, %p87
    %p89 = scmp.ne.s32.totalorder %s81, %s84
    %p90 = scmp.eq.s32.totalorder %s8, 0
    %p91 = por %p89, %p90
    %p92 = scmp.ne.s32.totalorder %s81, %s84
    %p93 = scmp.eq.s32.totalorder %s13, 1
    %p94 = por %p92, %p93
    %p95 = scmp.ne.s32.totalorder %s84, %s85
    %p96 = scmp.eq.s32.totalorder %s13, 0
    %p97 = por %p95, %p96
    %p98 = scmp.ne.s32.totalorder %s84, %s85
    %p99 = scmp.eq.s32.totalorder %s14, 1
    %p100 = por %p98, %p99
    %p102 = scmp.ne.s32.totalorder %s85, %s101
    %p103 = scmp.eq.s32.totalorder %s14, 0
    %p104 = por %p102, %p103
    %p105 = scmp.le.s32.totalorder 1, %s8
    %p106 = scmp.lt.s32.totalorder %s8, 3
    %p107 = pnand %p105, %p106
    %p108 = pneg %p107
    // Predicated region
    $region9: #{patchify2d_forward.1} parent=5 // pred_check
      _
    $region10: #{patchify2d_forward.1} parent=5 // pred_check_branch
      %110 = sbr.rel (%p107) target = $region12
    $region11: #{patchify2d_forward.1} parent=5 // pred_region
      %s111 = ssub.s32 %s8, 1
      // Predicated region
      $region13: #{patchify2d_forward.1} parent=11 // pred_check
        %p112 = pneg %p41
      $region14: #{patchify2d_forward.1} parent=11 // pred_check_branch
        %114 = sbr.rel (%p112) target = $region16
      $region15: #{patchify2d_forward.1} parent=11 // pred_region
        _
      $region16: #{patchify2d_forward.1} parent=11 // pred_fallthru
        _
    $region12: #{patchify2d_forward.1} parent=5 // pred_fallthru
      _
    %p115 = scmp.lt.s32.totalorder %s8, 2
    // Predicated region
    $region17: #{patchify2d_forward.1} parent=5 // pred_check
      %p116 = pneg %p115
    $region18: #{patchify2d_forward.1} parent=5 // pred_check_branch
      %118 = sbr.rel (%p116) target = $region20
    $region19: #{patchify2d_forward.1} parent=5 // pred_region
      // Predicated region
      $region21: #{patchify2d_forward.1} parent=19 // pred_check
        %p119 = pneg %p63
      $region22: #{patchify2d_forward.1} parent=19 // pred_check_branch
        %121 = sbr.rel (%p119) target = $region24
      $region23: #{patchify2d_forward.1} parent=19 // pred_region
        %p122 = scmp.lt.s32.totalorder %s15, 1
        %s123 = scalar_select %p122, %s15, 1
        %p124 = scmp.lt.s32.totalorder %s16, 0
        %s125 = scalar_select %p124, %s16, 0
        %s126 = smul.addr %s123, 2
        %s127 = sadd.s32 %s125, %s126
        %s128 = smul.addr %s127, 8
        %s129 = scalar_lea.vmem %s1, %s128
      $region24: #{patchify2d_forward.1} parent=19 // pred_fallthru
        _
    $region20: #{patchify2d_forward.1} parent=5 // pred_fallthru
      _
    %p130 = scmp.le.s32.totalorder 1, %s8
    %p131 = scmp.lt.s32.totalorder %s8, 3
    %p132 = pnand %p130, %p131
    %p133 = pneg %p132
    // Predicated region
    $region25: #{patchify2d_forward.1} parent=5 // pred_check
      _
    $region26: #{patchify2d_forward.1} parent=5 // pred_check_branch
      %135 = sbr.rel (%p132) target = $region28
    $region27: #{patchify2d_forward.1} parent=5 // pred_region
      %s136 = ssub.s32 %s8, 1
      %p137 = pneg %p41
      %p138 = pneg %p38
      %p139 = scmp.lt.s32.totalorder %s17, 1
      %s140 = scalar_select %p139, %s17, 1
      %p141 = scmp.lt.s32.totalorder %s18, 0
      %s142 = scalar_select %p141, %s18, 0
      %s143 = smul.addr %s140, 2
      %s144 = sadd.s32 %s142, %s143
      %s145 = smul.addr %s144, 8
      %s146 = scalar_lea.vmem %s1, %s145
      %p147 = pneg %p69
      %p148 = pneg %p66
      %p149 = pneg %p97
      %p150 = pneg %p94
      %p151 = scmp.lt.s32.totalorder %s17, 1
      %s152 = scalar_select %p151, %s17, 1
      %p153 = scmp.lt.s32.totalorder %s18, 0
      %s154 = scalar_select %p153, %s18, 0
      %s155 = smul.addr %s152, 4
      %s156 = sadd.s32 %s154, %s155
      %s157 = smul.addr %s156, 8
      %s158 = scalar_lea.vmem %s2, %s157
      %p159 = scmp.lt.s32.totalorder %s17, 1
      %s160 = scalar_select %p159, %s17, 1
      %p161 = scmp.lt.s32.totalorder %s18, 0
      %s162 = scalar_select %p161, %s18, 0
      %s163 = smul.addr %s160, 2
      %s164 = sadd.s32 %s162, %s163
      %s165 = smul.addr %s164, 8
      %s166 = scalar_lea.vmem %s1, %s165
      %p167 = scmp.lt.s32.totalorder %s17, 1
      %s168 = scalar_select %p167, %s17, 1
      %p169 = scmp.lt.s32.totalorder %s18, 0
      %s170 = scalar_select %p169, %s18, 0
      %s171 = smul.addr %s168, 4
      %s172 = sadd.s32 %s170, %s171
      %s173 = smul.addr %s172, 8
      %s174 = scalar_lea.vmem %s2, %s173
      %v175 = vld [vmem:[%s0] sm:$0xff]
      %v176 = vld [vmem:[%s0 + $0x8] sm:$0xff]
      %v177 = vld [vmem:[%s0 + $0x10] sm:$0xff]
      %v178 = vld [vmem:[%s0 + $0x18] sm:$0xff]
      %v179 = vld [vmem:[%s166] sm:$0xff]
      %v180 = vld [vmem:[%s166 + $0x8] sm:$0xff]
      %vm181 = vcmask 130048
      %v183 = vsel %vm181, %v175, 0
      %v186 = vsel %vm181, %v176, 0
      %v189 = vsel %vm181, %v177, 0
      %v192 = vsel %vm181, %v178, 0
      %194 = vmatprep.subr.mxu0 0.0
      %195 = vmatpush1.msra.mxu0 0.0
      %196 = vmatprep.subr.mxu0 0.0
      %197 = vmatpush1.msra.mxu0 0.0
      %198 = vmatprep.subr.mxu0 0.0
      %199 = vmatpush1.msra.mxu0 0.0
      %200 = vmatprep.subr.mxu0 0.0
      %201 = vmatpush1.msra.mxu0 0.0
      %202 = vmatprep.subr.mxu0 0.0
      %203 = vmatpush1.msra.mxu0 0.0
      %204 = vmatprep.subr.mxu0 0.0
      %205 = vmatpush1.msra.mxu0 0.0
      %206 = vmatprep.subr.mxu0 0.0
      %207 = vmatpush1.msra.mxu0 0.0
      %208 = vmatprep.subr.mxu0 0.0
      %209 = vmatpush1.msra.mxu0 0.0
      %210 = vmatprep.subr.mxu0 0.0
      %211 = vmatpush1.msra.mxu0 0.0
      %212 = vmatprep.subr.mxu0 0.0
      %213 = vmatpush1.msra.mxu0 0.0
      %214 = vmatprep.subr.mxu0 0.0
      %215 = vmatpush1.msra.mxu0 0.0
      %216 = vmatprep.subr.mxu0 0.0
      %217 = vmatpush1.msra.mxu0 0.0
      %218 = vmatprep.subr.mxu0 0.0
      %219 = vmatpush1.msra.mxu0 0.0
      %220 = vmatprep.subr.mxu0 0.0
      %221 = vmatpush1.msra.mxu0 0.0
      %222 = vmatprep.subr.mxu0 0.0
      %223 = vmatpush1.msra.mxu0 %v180
      %224 = vmatprep.subr.mxu0 0.0
      %225 = vmatpush1.msra.mxu0 %v179
      %226 = vmatprep.subr.mxu0 0.0
      %227 = vmatpush2.msra.mxu0 0.0
      %228 = vmatprep.subr.mxu0 0.0
      %229 = vmatpush2.msra.mxu0 0.0
      %230 = vmatprep.subr.mxu0 0.0
      %231 = vmatpush2.msra.mxu0 0.0
      %232 = vmatprep.subr.mxu0 0.0
      %233 = vmatpush2.msra.mxu0 0.0
      %234 = vmatprep.subr.mxu0 0.0
      %235 = vmatpush2.msra.mxu0 0.0
      %236 = vmatprep.subr.mxu0 0.0
      %237 = vmatpush2.msra.mxu0 0.0
      %238 = vmatprep.subr.mxu0 0.0
      %239 = vmatpush2.msra.mxu0 0.0
      %240 = vmatprep.subr.mxu0 0.0
      %241 = vmatpush2.msra.mxu0 0.0
      %242 = vmatprep.subr.mxu0 0.0
      %243 = vmatpush2.msra.mxu0 0.0
      %244 = vmatprep.subr.mxu0 0.0
      %245 = vmatpush2.msra.mxu0 0.0
      %246 = vmatprep.subr.mxu0 0.0
      %247 = vmatpush2.msra.mxu0 0.0
      %248 = vmatprep.subr.mxu0 0.0
      %249 = vmatpush2.msra.mxu0 0.0
      %250 = vmatprep.subr.mxu0 0.0
      %251 = vmatpush2.msra.mxu0 0.0
      %252 = vmatprep.subr.mxu0 0.0
      %253 = vmatpush2.msra.mxu0 0.0
      %254 = vmatprep.subr.mxu0 0.0
      %255 = vmatpush2.msra.mxu0 0.0
      %256 = vmatprep.subr.mxu0 0.0
      %257 = vmatpush2.msra.mxu0 0.0
      %258 = vmatprep.mubr.f32.mxu0 0.0
      %259 = vmatmul.mubr.f32.gmra.mxu0 %v183
      %v260 = vpop.f32.mrf.mxu0
      %v261 = vadd.f32 0.0, %v260
      %v262 = vpop.f32.mrf.mxu0
      %263 = vmatprep.mubr.f32.mxu0 0.0
      %264 = vmatmul.mubr.f32.gmra.mxu0 %v186
      %v265 = vpop.f32.mrf.mxu0
      %v266 = vadd.f32 0.0, %v265
      %v267 = vpop.f32.mrf.mxu0
      %268 = vmatprep.mubr.f32.mxu0 0.0
      %269 = vmatmul.mubr.f32.gmra.mxu0 %v189
      %v270 = vpop.f32.mrf.mxu0
      %v271 = vadd.f32 0.0, %v270
      %v272 = vpop.f32.mrf.mxu0
      %273 = vmatprep.mubr.f32.mxu0 0.0
      %274 = vmatmul.mubr.f32.gmra.mxu0 %v192
      %v275 = vpop.f32.mrf.mxu0
      %v276 = vadd.f32 0.0, %v275
      %v277 = vpop.f32.mrf.mxu0
      %278 = vdwg.mxu0
      %vm279 = vcmask 523264
      %280 = vst.msk [vmem:[%s174] sm:$0xff] %vm279, %v261
      %281 = vst.msk [vmem:[%s174 + $0x8] sm:$0xff] %vm279, %v266
      %282 = vst.msk [vmem:[%s174 + $0x10] sm:$0xff] %vm279, %v271
      %283 = vst.msk [vmem:[%s174 + $0x18] sm:$0xff] %vm279, %v276
      %p284 = scmp.lt.s32.totalorder %s17, 1
      %s285 = scalar_select %p284, %s17, 1
      %p286 = scmp.lt.s32.totalorder %s18, 0
      %s287 = scalar_select %p286, %s18, 0
      %s288 = smul.addr %s285, 4
      %s289 = sadd.s32 %s287, %s288
      %s290 = smul.addr %s289, 8
      %s291 = scalar_lea.vmem %s2, %s290
      // Predicated region
      $region29: #{patchify2d_forward.1} parent=27 // pred_check
        %p292 = pneg %p94
      $region30: #{patchify2d_forward.1} parent=27 // pred_check_branch
        %294 = sbr.rel (%p292) target = $region32
      $region31: #{patchify2d_forward.1} parent=27 // pred_region
        _
      $region32: #{patchify2d_forward.1} parent=27 // pred_fallthru
        _
    $region28: #{patchify2d_forward.1} parent=5 // pred_fallthru
      _
    %p295 = scmp.le.s32.totalorder 2, %s8
    // Predicated region
    $region33: #{patchify2d_forward.1} parent=5 // pred_check
      %p296 = pneg %p295
    $region34: #{patchify2d_forward.1} parent=5 // pred_check_branch
      %298 = sbr.rel (%p296) target = $region36
    $region35: #{patchify2d_forward.1} parent=5 // pred_region
      %s299 = ssub.s32 %s8, 2
      // Predicated region
      $region37: #{patchify2d_forward.1} parent=35 // pred_check
        %p300 = pneg %p100
      $region38: #{patchify2d_forward.1} parent=35 // pred_check_branch
        %302 = sbr.rel (%p300) target = $region40
      $region39: #{patchify2d_forward.1} parent=35 // pred_region
        %p303 = scmp.lt.s32.totalorder %s19, 1
        %s304 = scalar_select %p303, %s19, 1
        %p305 = scmp.lt.s32.totalorder %s20, 0
        %s306 = scalar_select %p305, %s20, 0
        %s307 = smul.addr %s304, 4
        %s308 = sadd.s32 %s306, %s307
        %s309 = smul.addr %s308, 8
        %s310 = scalar_lea.vmem %s2, %s309
      $region40: #{patchify2d_forward.1} parent=35 // pred_fallthru
        _
    $region36: #{patchify2d_forward.1} parent=5 // pred_fallthru
      _
  $region6: #{patchify2d_forward.1} parent=0 // loop_footer
    %s12 = sadd.s32 1, %s8
  $region7: #{patchify2d_forward.1} parent=0 // loop_footer_branch
    %7 = sbr.rel target = $region3
  $region8: #{patchify2d_forward.1} parent=0 // loop_exit
    _

</llo_original>
